<compile_context>
chip_gen: v7x
topology: tpu7x:2x2x1
jax: 0.10.0
libtpu: 0.0.40
codegen_flags: <defaults>
</compile_context>

<pallas_src>
import math
import functools

import jax
import jax.numpy as jnp
from jax import lax
from jax.experimental import pallas as pl
from jax.experimental.pallas import tpu as pltpu


def _lorentz_epilogue(sum_x, c):
    # sum_x: (bm, F) f32.  Feature axis is never tiled, so column 0 is always the Lorentz
    # time coordinate.  One cross-lane reduction; Minkowski dot = total - 2*x0^2.
    sq = sum_x * sum_x
    total = jnp.sum(sq, axis=-1, keepdims=True)
    x_inner = total - 2.0 * sq[:, 0:1]
    coeff = math.sqrt(c) * lax.rsqrt(jnp.abs(x_inner))     # EUP rsqrt
    return coeff * sum_x


def _kernel_single(adj_ref, x_ref, o_ref, *, c):
    # Whole contraction in one step: adj tile (bm, N) @ x (N, F).
    sum_x = jnp.dot(adj_ref[...], x_ref[...], preferred_element_type=jnp.float32)
    o_ref[...] = _lorentz_epilogue(sum_x, c).astype(o_ref.dtype)


def _kernel_multi_f32(adj_ref, x_ref, o_ref, *, c, bk):
    # f32 output: accumulate directly into the resident output block (no scratch).
    k = pl.program_id(1)

    @pl.when(k == 0)
    def _():
        o_ref[...] = jnp.zeros_like(o_ref)

    start = pl.multiple_of(k * bk, bk)
    o_ref[...] += jnp.dot(adj_ref[...], x_ref[pl.ds(start, bk), :],
                          preferred_element_type=jnp.float32)

    @pl.when(k == pl.num_programs(1) - 1)
    def _():
        o_ref[...] = _lorentz_epilogue(o_ref[...], c)


def _kernel_multi_scratch(adj_ref, x_ref, o_ref, acc_ref, *, c, bk):
    # Non-f32 output: keep an f32 VMEM accumulator, cast once at the end.
    k = pl.program_id(1)

    @pl.when(k == 0)
    def _():
        acc_ref[...] = jnp.zeros_like(acc_ref)

    start = pl.multiple_of(k * bk, bk)
    acc_ref[...] += jnp.dot(adj_ref[...], x_ref[pl.ds(start, bk), :],
                            preferred_element_type=jnp.float32)

    @pl.when(k == pl.num_programs(1) - 1)
    def _():
        o_ref[...] = _lorentz_epilogue(acc_ref[...], c).astype(o_ref.dtype)


def _pick_config(n, f, out_dtype, compute_dtype):
    cb = jnp.dtype(compute_dtype).itemsize
    ob = jnp.dtype(out_dtype).itemsize

    try:
        vmem_cap = int(pltpu.get_tpu_info().vmem_capacity_bytes)
    except Exception:
        vmem_cap = 64 * 1024 * 1024                       # conservative (v7x)
    budget = int(0.70 * vmem_cap)

    # Row tile: as large as possible but keep >=2 row tiles so both v7x TCs get work.
    bm = n
    for cand in (512, 256, 128, 64, 32, 16, 8):
        if cand < n and n % cand == 0 and (n // cand) >= 2:
            bm = cand
            break

    def est(bk):
        return (2 * bm * bk * cb           # double-buffered adj tiles
                + 2 * n * f * cb           # resident x (budget 2 buffers to be safe)
                + 2 * bm * f * ob          # output tiles
                + bm * f * 4)              # f32 accumulator / headroom

    # Contraction tile: whole row if it fits VMEM (single-pass fast path), else halve
    # while keeping lane alignment and divisibility.
    bk = n
    while est(bk) > budget and bk % 2 == 0 and (bk // 2) % 128 == 0 and n % (bk // 2) == 0:
        bk //= 2

    vmem_limit = int(min(max(2 * est(bk), 32 * 1024 * 1024), int(0.9 * vmem_cap)))
    return bm, bk, vmem_limit


def lorentz_agg(x, adj, c, *, block_rows=None, block_k=None, compute_dtype=jnp.bfloat16):
    n, f = x.shape
    assert adj.shape == (n, n)
    assert f >= 2, "need a time coordinate plus at least one space coordinate"

    bm_auto, bk_auto, vmem_limit = _pick_config(n, f, x.dtype, compute_dtype)
    bm = block_rows if block_rows is not None else bm_auto
    bk = block_k if block_k is not None else bk_auto
    assert n % bm == 0 and n % bk == 0, "node count must be divisible by the tile sizes"

    # bf16 operands, f32 accumulation (MXU native rate, half the adj HBM traffic).
    adj_c = adj.astype(compute_dtype)
    x_c = x.astype(compute_dtype)
    out_shape = jax.ShapeDtypeStruct((n, f), x.dtype)

    if bk == n:
        # Fast path: no reduction axis, no accumulator.
        kernel = functools.partial(_kernel_single, c=float(c))
        grid_spec = pltpu.PrefetchScalarGridSpec(
            num_scalar_prefetch=0,
            grid=(n // bm,),
            in_specs=[
                pl.BlockSpec((bm, n), lambda i: (i, 0)),       # adj row stripe
                pl.BlockSpec((n, f), lambda i: (0, 0)),        # x resident (fetched once)
            ],
            out_specs=pl.BlockSpec((bm, f), lambda i: (i, 0)),
        )
        dim_sem = ("parallel",)
    else:
        if x.dtype == jnp.float32:
            kernel = functools.partial(_kernel_multi_f32, c=float(c), bk=bk)
            scratch = []
        else:
            kernel = functools.partial(_kernel_multi_scratch, c=float(c), bk=bk)
            scratch = [pltpu.VMEM((bm, f), jnp.float32)]
        grid_spec = pltpu.PrefetchScalarGridSpec(
            num_scalar_prefetch=0,
            grid=(n // bm, n // bk),                           # reduction axis last
            in_specs=[
                pl.BlockSpec((bm, bk), lambda i, k: (i, k)),   # adj tile
                pl.BlockSpec((n, f), lambda i, k: (0, 0)),     # x resident (fetched once)
            ],
            out_specs=pl.BlockSpec((bm, f), lambda i, k: (i, 0)),
            scratch_shapes=scratch,
        )
        dim_sem = ("parallel", "arbitrary")

    return pl.pallas_call(
        kernel,
        out_shape=out_shape,
        grid_spec=grid_spec,
        compiler_params=pltpu.CompilerParams(
            dimension_semantics=dim_sem,
            vmem_limit_bytes=vmem_limit,
        ),
    )(adj_c, x_c)


if __name__ == "__main__":
    key = jax.random.PRNGKey(0)
    n, f = 512, 128          # nodes, Lorentz feature dim (lane-dense)
    c = 1.0

    kx, ka = jax.random.split(key)

    # Points on the hyperboloid: x0 = sqrt(1/c + ||x_space||^2).
    space = 0.1 * jax.random.normal(kx, (n, f - 1), dtype=jnp.float32)
    x0 = jnp.sqrt(1.0 / c + jnp.sum(space * space, axis=-1, keepdims=True))
    x = jnp.concatenate([x0, space], axis=-1)                   # (n, f)

    # Dense row-normalized adjacency with self loops (use_att=False: torch.spmm(adj, x)).
    adj_raw = (jax.random.uniform(ka, (n, n)) < 0.05).astype(jnp.float32)
    adj_raw = adj_raw + jnp.eye(n, dtype=jnp.float32)
    adj = adj_raw / jnp.sum(adj_raw, axis=-1, keepdims=True)

    out_fast = lorentz_agg(x, adj, c)                                # single-pass path
    out_tiled = lorentz_agg(x, adj, c, block_rows=128, block_k=128)  # tiled reduction path
    jax.block_until_ready((out_fast, out_tiled))

    # Reference 1: same bf16 operands as the kernel, f32 accumulation.
    adj_r = adj.astype(jnp.bfloat16).astype(jnp.float32)
    x_r = x.astype(jnp.bfloat16).astype(jnp.float32)
    sum_x = adj_r @ x_r
    x_inner = jnp.sum(sum_x * sum_x, axis=-1) - 2.0 * sum_x[:, 0] ** 2
    ref = (math.sqrt(c) / jnp.sqrt(jnp.abs(x_inner)))[:, None] * sum_x

    # Reference 2: full-precision semantics of the original module (looser tolerance,
    # accounts for the bf16 cast of adj/x).
    sum_x32 = adj @ x
    x_inner32 = jnp.sum(sum_x32 * sum_x32, axis=-1) - 2.0 * sum_x32[:, 0] ** 2
    ref32 = (math.sqrt(c) / jnp.sqrt(jnp.abs(x_inner32)))[:, None] * sum_x32

    for out in (out_fast, out_tiled):
        assert out.shape == (n, f)
        assert bool(jnp.all(jnp.isfinite(out)))
        assert bool(jnp.allclose(out, ref, rtol=5e-3, atol=5e-4))
        assert bool(jnp.allclose(out, ref32, rtol=5e-2, atol=5e-3))
    print("KERNEL_OK")
</pallas_src>

<mosaic_0001>
module attributes {stable_mosaic.version = 11 : i64} {
  func.func @_kernel_single(%arg0: i32, %arg1: memref<256x512xbf16, #tpu.memory_space<vmem>>, %arg2: memref<512x128xbf16, #tpu.memory_space<vmem>>, %arg3: memref<256x128xf32, #tpu.memory_space<vmem>>) attributes {dimension_semantics = [#tpu.dimension_semantics<parallel>], iteration_bounds = array<i64: 2>, scalar_prefetch = 0 : i64, scratch_operands = 0 : i64, tpu.core_type = #tpu.core_type<tc>, window_params = [{transform_indices = @transform_0, window_bounds = array<i64: 256, 512>}, {pipeline_mode = #tpu.pipeline_mode<synchronous>, transform_indices = @transform_1, window_bounds = array<i64: 512, 128>}, {transform_indices = @transform_2, window_bounds = array<i64: 256, 128>}]} {
    %c0 = arith.constant 0 : index
    %c0_0 = arith.constant 0 : index
    %0 = vector.load %arg1[%c0, %c0_0] : memref<256x512xbf16, #tpu.memory_space<vmem>>, vector<256x512xbf16>
    %c0_1 = arith.constant 0 : index
    %c0_2 = arith.constant 0 : index
    %1 = vector.load %arg2[%c0_1, %c0_2] : memref<512x128xbf16, #tpu.memory_space<vmem>>, vector<512x128xbf16>
    %cst = arith.constant dense<0.000000e+00> : vector<256x128xf32>
    %2 = tpu.matmul %0, %1, %cst {dimension_numbers = #tpu.dot_dimension_numbers<[1], [0], [0], [1], [0, 0, 1, 1], [], []>} : vector<256x512xbf16>, vector<512x128xbf16>, vector<256x128xf32> -> vector<256x128xf32>
    %3 = arith.mulf %2, %2 : vector<256x128xf32>
    %cst_3 = arith.constant dense<0.000000e+00> : vector<256xf32>
    %4 = vector.multi_reduction <add>, %3, %cst_3 [1] : vector<256x128xf32> to vector<256xf32>
    %5 = vector.shape_cast %4 : vector<256xf32> to vector<256x1xf32>
    %6 = vector.extract_strided_slice %3 {offsets = [0, 0], sizes = [256, 1], strides = [1, 1]} : vector<256x128xf32> to vector<256x1xf32>
    %cst_4 = arith.constant 2.000000e+00 : f32
    %7 = vector.broadcast %cst_4 : f32 to vector<256x1xf32>
    %8 = arith.mulf %7, %6 : vector<256x1xf32>
    %9 = arith.subf %5, %8 : vector<256x1xf32>
    %10 = math.absf %9 : vector<256x1xf32>
    %11 = math.rsqrt %10 : vector<256x1xf32>
    %cst_5 = arith.constant 1.000000e+00 : f32
    %12 = vector.broadcast %cst_5 : f32 to vector<256x1xf32>
    %13 = arith.mulf %12, %11 : vector<256x1xf32>
    %14 = vector.broadcast %13 : vector<256x1xf32> to vector<256x128xf32>
    %15 = arith.mulf %14, %2 : vector<256x128xf32>
    %c0_6 = arith.constant 0 : index
    %c0_7 = arith.constant 0 : index
    %16 = vector.load %arg3[%c0_6, %c0_7] : memref<256x128xf32, #tpu.memory_space<vmem>>, vector<256x128xf32>
    tpu.vector_store %arg3[%c0_6, %c0_7], %15 {strides = array<i32>} : memref<256x128xf32, #tpu.memory_space<vmem>>, vector<256x128xf32>,
    return
  }
  func.func @transform_0(%arg0: i32) -> (i32, i32) {
    %c0_i32 = arith.constant 0 : i32
    %c0_i32_0 = arith.constant 0 : i32
    return %arg0, %c0_i32 : i32, i32
  }
  func.func @transform_1(%arg0: i32) -> (i32, i32) {
    %c0_i32 = arith.constant 0 : i32
    %c0_i32_0 = arith.constant 0 : i32
    %c0_i32_1 = arith.constant 0 : i32
    return %c0_i32, %c0_i32_0 : i32, i32
  }
  func.func @transform_2(%arg0: i32) -> (i32, i32) {
    %c0_i32 = arith.constant 0 : i32
    %c0_i32_0 = arith.constant 0 : i32
    return %arg0, %c0_i32 : i32, i32
  }
}

</mosaic_0001>

<llo_original>
// kernel: tpu_custom_call.1
$region0: #{tpu_custom_call.1}
  #allocation0 [shape = 'u32[]', space=smem, size = 0x4, offset = 0x4, fixed_abs, tag = 'smem constant byte address 0x4 - core index']
  #allocation1 [shape = 'u32[144,128]{1,0:T(1,128)}', space=vmem, size = 0x12000, scoped, tag = 'internal scratch']
  %s0 = inlined_call_operand.hbm [shape: bf16[512,512], index: 0, kind: input, shape index: {}]
  %s1 = inlined_call_operand.hbm [shape: bf16[512,128], index: 1, kind: input, shape index: {}]
  %s2 = inlined_call_operand.hbm [shape: f32[512,128], index: 2, kind: output, shape index: {}]
  %s3 = sld [smem:[#allocation0]]
  $region49: #{tpu_custom_call.1} parent=0
    _
  %s5 = ssub.s32 1, %s3
  %s6 = scalar_select 0, %s5, %s3
  $region1: #{tpu_custom_call.1} parent=0
    #allocation2 [shape = 'u8[524288]{0}', space=vmem, size = 0x80000, scoped, tag = 'input window, operand 0']
    #allocation3 [shape = 's32[2]{0}', space=sflag, size = 0x8, scoped, tag = 'scoped memory for tpu_custom_call.1']
    #allocation4 [shape = 's32[2]{0}', space=sflag, size = 0x8, scoped, tag = 'scoped memory for tpu_custom_call.1']
    #allocation5 [shape = 'u8[131072]{0}', space=vmem, size = 0x20000, scoped, tag = 'input window, operand 1, single buffered']
    #allocation6 [shape = 's32[1]{0}', space=sflag, size = 0x4, scoped, tag = 'scoped memory for tpu_custom_call.1']
    #allocation7 [shape = 'u8[262144]{0}', space=vmem, size = 0x40000, scoped, tag = 'output window, operand 0']
    %7 = vsyncpa [#allocation3], 0
    %s8 = scalar_lea.sflag [#allocation3], 1
    %9 = vsyncpa %s8, 0
    %10 = vsyncpa [#allocation6], 0
    %11 = vsyncpa [#allocation4], 0
    %s12 = scalar_lea.sflag [#allocation4], 1
    %13 = vsyncpa %s12, 0
    loop: start=0, step=1, limit=4
    $region2: #{tpu_custom_call.1} parent=1 // loop_pre_header
      _
    $region3: #{tpu_custom_call.1} parent=1 // loop_header
      %s15 = sphi 0, %s19
      %p16 = scmp.ge.s32.totalorder %s15, 4
      %s25 = sphi 0, %s27
      %s28 = sphi 0, %s25
      %s29 = sphi 0, %s28
      %s45 = sphi 0, %s29
      %s49 = sphi 0, %s49
      %s51 = sphi 0, %s49
      %s52 = sphi 0, %s51
      %s66 = sphi 0, %s52
      %s72 = sphi 0, %s74
      %s75 = sphi 0, %s72
      %s76 = sphi 0, %s75
      %s92 = sphi 0, %s76
    $region4: #{tpu_custom_call.1} parent=1 // loop_header_branch
      %18 = sbr.rel (%p16) target = $region8
    $region5: #{tpu_custom_call.1} parent=1 // loop_body
      %s20 = ssub.s32 %s15, 1
      %s21 = ssub.s32 %s15, 2
      %s22 = sadd.s32 %s15, 1
      %s23 = ssub.s32 %s15, %s22
      %p24 = scmp.eq.s32.totalorder %s23, 0
      %s26 = sadd.s32 %s25, 1
      %s27 = scalar_select %p24, %s25, %s26
      %p30 = pneg %p24
      %p31 = scmp.eq.s32.totalorder %s15, 1
      %p32 = por %p30, %p31
      %p33 = scmp.ne.s32.totalorder %s25, %s28
      %p34 = scmp.eq.s32.totalorder %s15, 0
      %p35 = por %p33, %p34
      %p36 = scmp.ne.s32.totalorder %s25, %s28
      %p37 = scmp.eq.s32.totalorder %s20, 1
      %p38 = por %p36, %p37
      %p39 = scmp.ne.s32.totalorder %s28, %s29
      %p40 = scmp.eq.s32.totalorder %s20, 0
      %p41 = por %p39, %p40
      %p42 = scmp.ne.s32.totalorder %s28, %s29
      %p43 = scmp.eq.s32.totalorder %s21, 1
      %p44 = por %p42, %p43
      %p46 = scmp.ne.s32.totalorder %s29, %s45
      %p47 = scmp.eq.s32.totalorder %s21, 0
      %p48 = por %p46, %p47
      %s50 = sadd.s32 %s49, 1
      %p53 = scmp.eq.s32.totalorder %s15, 1
      %p54 = scmp.ne.s32.totalorder %s49, %s51
      %p55 = scmp.eq.s32.totalorder %s15, 0
      %p56 = por %p54, %p55
      %p57 = scmp.ne.s32.totalorder %s49, %s51
      %p58 = scmp.eq.s32.totalorder %s20, 1
      %p59 = por %p57, %p58
      %p60 = scmp.ne.s32.totalorder %s51, %s52
      %p61 = scmp.eq.s32.totalorder %s20, 0
      %p62 = por %p60, %p61
      %p63 = scmp.ne.s32.totalorder %s51, %s52
      %p64 = scmp.eq.s32.totalorder %s21, 1
      %p65 = por %p63, %p64
      %p67 = scmp.ne.s32.totalorder %s52, %s66
      %p68 = scmp.eq.s32.totalorder %s21, 0
      %p69 = por %p67, %p68
      %s70 = ssub.s32 %s15, %s22
      %p71 = scmp.eq.s32.totalorder %s70, 0
      %s73 = sadd.s32 %s72, 1
      %s74 = scalar_select %p71, %s72, %s73
      %p77 = pneg %p71
      %p78 = scmp.eq.s32.totalorder %s15, 1
      %p79 = por %p77, %p78
      %p80 = scmp.ne.s32.totalorder %s72, %s75
      %p81 = scmp.eq.s32.totalorder %s15, 0
      %p82 = por %p80, %p81
      %p83 = scmp.ne.s32.totalorder %s72, %s75
      %p84 = scmp.eq.s32.totalorder %s20, 1
      %p85 = por %p83, %p84
      %p86 = scmp.ne.s32.totalorder %s75, %s76
      %p87 = scmp.eq.s32.totalorder %s20, 0
      %p88 = por %p86, %p87
      %p89 = scmp.ne.s32.totalorder %s75, %s76
      %p90 = scmp.eq.s32.totalorder %s21, 1
      %p91 = por %p89, %p90
      %p93 = scmp.ne.s32.totalorder %s76, %s92
      %p94 = scmp.eq.s32.totalorder %s21, 0
      %p95 = por %p93, %p94
      %p96 = scmp.le.s32.totalorder 1, %s15
      %p97 = scmp.lt.s32.totalorder %s15, 3
      %p98 = pnand %p96, %p97
      %p99 = pneg %p98
      // Predicated region
      $region9: #{tpu_custom_call.1} parent=5 // pred_check
        _
      $region10: #{tpu_custom_call.1} parent=5 // pred_check_branch
        %101 = sbr.rel (%p98) target = $region12
      $region11: #{tpu_custom_call.1} parent=5 // pred_region
        %s102 = ssub.s32 %s15, 1
        // Predicated region
        $region13: #{tpu_custom_call.1} parent=11 // pred_check
          %p103 = pneg %p62
        $region14: #{tpu_custom_call.1} parent=11 // pred_check_branch
          %105 = sbr.rel (%p103) target = $region16
        $region15: #{tpu_custom_call.1} parent=11 // pred_region
          %s107 = ssub.s32 4096, 4096
          %108 = vsyncadd [#allocation6], %s107
          %s109 = sshll.u32 [#allocation5], 4
          %s110 = int_to_ptr.vmem [resolvable:$true] %s109
          %115 = dma.hbm_to_vmem [thread:$0]  %s1, 4096, %s110, [#allocation6], 64, 64, 4
        $region16: #{tpu_custom_call.1} parent=11 // pred_fallthru
          _
      $region12: #{tpu_custom_call.1} parent=5 // pred_fallthru
        _
      %p116 = scmp.lt.s32.totalorder %s15, 2
      // Predicated region
      $region17: #{tpu_custom_call.1} parent=5 // pred_check
        %p117 = pneg %p116
      $region18: #{tpu_custom_call.1} parent=5 // pred_check_branch
        %119 = sbr.rel (%p117) target = $region20
      $region19: #{tpu_custom_call.1} parent=5 // pred_region
        // Predicated region
        $region21: #{tpu_custom_call.1} parent=19 // pred_check
          %p120 = pneg %p35
        $region22: #{tpu_custom_call.1} parent=19 // pred_check_branch
          %122 = sbr.rel (%p120) target = $region24
        $region23: #{tpu_custom_call.1} parent=19 // pred_region
          %s123 = sand.u32 %s25, 1
          %s124 = scalar_lea.sflag [#allocation3], %s123
          %s125 = sand.u32 %s25, 1
          %s126 = smul.addr %s125, 512
          %s127 = scalar_lea.vmem [#allocation2], %s126
          %s128 = smul.u32 32, %s15
          %s130 = ssub.s32 8192, 8192
          %131 = vsyncadd %s124, %s130
          %s132 = smul.addr %s128, 4
          %s133 = smul.addr %s132, 64
          %s134 = scalar_lea.hbm %s0, %s133
          %s135 = sshll.u32 %s127, 4
          %s136 = int_to_ptr.vmem [resolvable:$true] %s135
          %141 = dma.hbm_to_vmem [thread:$0]  %s134, 8192, %s136, %s124, 256, 256, 16
        $region24: #{tpu_custom_call.1} parent=19 // pred_fallthru
          _
      $region20: #{tpu_custom_call.1} parent=5 // pred_fallthru
        _
      %p142 = scmp.le.s32.totalorder 1, %s15
      %p143 = scmp.lt.s32.totalorder %s15, 3
      %p144 = pnand %p142, %p143
      %p145 = pneg %p144
      // Predicated region
      $region25: #{tpu_custom_call.1} parent=5 // pred_check
        _
      $region26: #{tpu_custom_call.1} parent=5 // pred_check_branch
        %147 = sbr.rel (%p144) target = $region28
      $region27: #{tpu_custom_call.1} parent=5 // pred_region
        %s148 = ssub.s32 %s15, 1
        %s149 = sand.u32 %s28, 1
        %s150 = scalar_lea.sflag [#allocation3], %s149
        %s151 = sand.u32 %s28, 1
        %s152 = smul.addr %s151, 512
        %s153 = scalar_lea.vmem [#allocation2], %s152
        // Predicated region
        $region29: #{tpu_custom_call.1} parent=27 // pred_check
          %p154 = pneg %p41
        $region30: #{tpu_custom_call.1} parent=27 // pred_check_branch
          %156 = sbr.rel (%p154) target = $region32
        $region31: #{tpu_custom_call.1} parent=27 // pred_region
          %157 = dma.done %s150, 8192
        $region32: #{tpu_custom_call.1} parent=27 // pred_fallthru
          _
        // Predicated region
        $region33: #{tpu_custom_call.1} parent=27 // pred_check
          %p158 = pneg %p62
        $region34: #{tpu_custom_call.1} parent=27 // pred_check_branch
          %160 = sbr.rel (%p158) target = $region36
        $region35: #{tpu_custom_call.1} parent=27 // pred_region
          %161 = dma.done [#allocation6], 4096
        $region36: #{tpu_custom_call.1} parent=27 // pred_fallthru
          _
        %s162 = sand.u32 %s28, 1
        %s163 = scalar_lea.sflag [#allocation3], %s162
        %s164 = sand.u32 %s28, 1
        %s165 = smul.addr %s164, 512
        %s166 = scalar_lea.vmem [#allocation2], %s165
        %p167 = pneg %p41
        %p168 = pneg %p38
        %p169 = pneg %p62
        %p170 = pneg %p59
        %p171 = pneg %p88
        %p172 = pneg %p85
        %s173 = sand.u32 %s75, 1
        %s174 = scalar_lea.sflag [#allocation4], %s173
        %s175 = sand.u32 %s75, 1
        %s176 = smul.addr %s175, 256
        %s177 = scalar_lea.vmem [#allocation7], %s176
        %s178 = smul.u32 32, %s20
        %s179 = smul.u32 32, %s20
        %v181 = vld [vmem:[%s153] sm:$0xff]
        %v182 = vld [vmem:[%s153 + $0x8] sm:$0xff]
        %v183 = vld [vmem:[%s153 + $0x10] sm:$0xff]
        %v184 = vld [vmem:[%s153 + $0x18] sm:$0xff]
        %v185 = vld [vmem:[%s153 + $0x20] sm:$0xff]
        %v186 = vld [vmem:[%s153 + $0x28] sm:$0xff]
        %v187 = vld [vmem:[%s153 + $0x30] sm:$0xff]
        %v188 = vld [vmem:[%s153 + $0x38] sm:$0xff]
        %v189 = vld [vmem:[%s153 + $0x40] sm:$0xff]
        %v190 = vld [vmem:[%s153 + $0x48] sm:$0xff]
        %v191 = vld [vmem:[%s153 + $0x50] sm:$0xff]
        %v192 = vld [vmem:[%s153 + $0x58] sm:$0xff]
        %v193 = vld [vmem:[%s153 + $0x60] sm:$0xff]
        %v194 = vld [vmem:[%s153 + $0x68] sm:$0xff]
        %v195 = vld [vmem:[%s153 + $0x70] sm:$0xff]
        %v196 = vld [vmem:[%s153 + $0x78] sm:$0xff]
        %v197 = vld [vmem:[%s153 + $0x80] sm:$0xff]
        %v198 = vld [vmem:[%s153 + $0x88] sm:$0xff]
        %v199 = vld [vmem:[%s153 + $0x90] sm:$0xff]
        %v200 = vld [vmem:[%s153 + $0x98] sm:$0xff]
        %v201 = vld [vmem:[%s153 + $0xa0] sm:$0xff]
        %v202 = vld [vmem:[%s153 + $0xa8] sm:$0xff]
        %v203 = vld [vmem:[%s153 + $0xb0] sm:$0xff]
        %v204 = vld [vmem:[%s153 + $0xb8] sm:$0xff]
        %v205 = vld [vmem:[%s153 + $0xc0] sm:$0xff]
        %v206 = vld [vmem:[%s153 + $0xc8] sm:$0xff]
        %v207 = vld [vmem:[%s153 + $0xd0] sm:$0xff]
        %v208 = vld [vmem:[%s153 + $0xd8] sm:$0xff]
        %v209 = vld [vmem:[%s153 + $0xe0] sm:$0xff]
        %v210 = vld [vmem:[%s153 + $0xe8] sm:$0xff]
        %v211 = vld [vmem:[%s153 + $0xf0] sm:$0xff]
        %v212 = vld [vmem:[%s153 + $0xf8] sm:$0xff]
        %v213 = vld [vmem:[%s153 + $0x100] sm:$0xff]
        %v214 = vld [vmem:[%s153 + $0x108] sm:$0xff]
        %v215 = vld [vmem:[%s153 + $0x110] sm:$0xff]
        %v216 = vld [vmem:[%s153 + $0x118] sm:$0xff]
        %v217 = vld [vmem:[%s153 + $0x120] sm:$0xff]
        %v218 = vld [vmem:[%s153 + $0x128] sm:$0xff]
        %v219 = vld [vmem:[%s153 + $0x130] sm:$0xff]
        %v220 = vld [vmem:[%s153 + $0x138] sm:$0xff]
        %v221 = vld [vmem:[%s153 + $0x140] sm:$0xff]
        %v222 = vld [vmem:[%s153 + $0x148] sm:$0xff]
        %v223 = vld [vmem:[%s153 + $0x150] sm:$0xff]
        %v224 = vld [vmem:[%s153 + $0x158] sm:$0xff]
        %v225 = vld [vmem:[%s153 + $0x160] sm:$0xff]
        %v226 = vld [vmem:[%s153 + $0x168] sm:$0xff]
        %v227 = vld [vmem:[%s153 + $0x170] sm:$0xff]
        %v228 = vld [vmem:[%s153 + $0x178] sm:$0xff]
        %v229 = vld [vmem:[%s153 + $0x180] sm:$0xff]
        %v230 = vld [vmem:[%s153 + $0x188] sm:$0xff]
        %v231 = vld [vmem:[%s153 + $0x190] sm:$0xff]
        %v232 = vld [vmem:[%s153 + $0x198] sm:$0xff]
        %v233 = vld [vmem:[%s153 + $0x1a0] sm:$0xff]
        %v234 = vld [vmem:[%s153 + $0x1a8] sm:$0xff]
        %v235 = vld [vmem:[%s153 + $0x1b0] sm:$0xff]
        %v236 = vld [vmem:[%s153 + $0x1b8] sm:$0xff]
        %v237 = vld [vmem:[%s153 + $0x1c0] sm:$0xff]
        %v238 = vld [vmem:[%s153 + $0x1c8] sm:$0xff]
        %v239 = vld [vmem:[%s153 + $0x1d0] sm:$0xff]
        %v240 = vld [vmem:[%s153 + $0x1d8] sm:$0xff]
        %v241 = vld [vmem:[%s153 + $0x1e0] sm:$0xff]
        %v242 = vld [vmem:[%s153 + $0x1e8] sm:$0xff]
        %v243 = vld [vmem:[%s153 + $0x1f0] sm:$0xff]
        %v244 = vld [vmem:[%s153 + $0x1f8] sm:$0xff]
        %v245 = vld [vmem:[#allocation5] sm:$0xf]
        %v246 = vld [vmem:[#allocation5 + $0x4] sm:$0xf]
        %v247 = vld [vmem:[#allocation5 + $0x8] sm:$0xf]
        %v248 = vld [vmem:[#allocation5 + $0xc] sm:$0xf]
        %v249 = vld [vmem:[#allocation5 + $0x10] sm:$0xf]
        %v250 = vld [vmem:[#allocation5 + $0x14] sm:$0xf]
        %v251 = vld [vmem:[#allocation5 + $0x18] sm:$0xf]
        %v252 = vld [vmem:[#allocation5 + $0x1c] sm:$0xf]
        %v253 = vld [vmem:[#allocation5 + $0x20] sm:$0xf]
        %v254 = vld [vmem:[#allocation5 + $0x24] sm:$0xf]
        %v255 = vld [vmem:[#allocation5 + $0x28] sm:$0xf]
        %v256 = vld [vmem:[#allocation5 + $0x2c] sm:$0xf]
        %v257 = vld [vmem:[#allocation5 + $0x30] sm:$0xf]
        %v258 = vld [vmem:[#allocation5 + $0x34] sm:$0xf]
        %v259 = vld [vmem:[#allocation5 + $0x38] sm:$0xf]
        %v260 = vld [vmem:[#allocation5 + $0x3c] sm:$0xf]
        %v261 = vld [vmem:[#allocation5 + $0x40] sm:$0xf]
        %v262 = vld [vmem:[#allocation5 + $0x44] sm:$0xf]
        %v263 = vld [vmem:[#allocation5 + $0x48] sm:$0xf]
        %v264 = vld [vmem:[#allocation5 + $0x4c] sm:$0xf]
        %v265 = vld [vmem:[#allocation5 + $0x50] sm:$0xf]
        %v266 = vld [vmem:[#allocation5 + $0x54] sm:$0xf]
        %v267 = vld [vmem:[#allocation5 + $0x58] sm:$0xf]
        %v268 = vld [vmem:[#allocation5 + $0x5c] sm:$0xf]
        %v269 = vld [vmem:[#allocation5 + $0x60] sm:$0xf]
        %v270 = vld [vmem:[#allocation5 + $0x64] sm:$0xf]
        %v271 = vld [vmem:[#allocation5 + $0x68] sm:$0xf]
        %v272 = vld [vmem:[#allocation5 + $0x6c] sm:$0xf]
        %v273 = vld [vmem:[#allocation5 + $0x70] sm:$0xf]
        %v274 = vld [vmem:[#allocation5 + $0x74] sm:$0xf]
        %v275 = vld [vmem:[#allocation5 + $0x78] sm:$0xf]
        %v276 = vld [vmem:[#allocation5 + $0x7c] sm:$0xf]
        %v277 = vld [vmem:[#allocation5 + $0x80] sm:$0xf]
        %v278 = vld [vmem:[#allocation5 + $0x84] sm:$0xf]
        %v279 = vld [vmem:[#allocation5 + $0x88] sm:$0xf]
        %v280 = vld [vmem:[#allocation5 + $0x8c] sm:$0xf]
        %v281 = vld [vmem:[#allocation5 + $0x90] sm:$0xf]
        %v282 = vld [vmem:[#allocation5 + $0x94] sm:$0xf]
        %v283 = vld [vmem:[#allocation5 + $0x98] sm:$0xf]
        %v284 = vld [vmem:[#allocation5 + $0x9c] sm:$0xf]
        %v285 = vld [vmem:[#allocation5 + $0xa0] sm:$0xf]
        %v286 = vld [vmem:[#allocation5 + $0xa4] sm:$0xf]
        %v287 = vld [vmem:[#allocation5 + $0xa8] sm:$0xf]
        %v288 = vld [vmem:[#allocation5 + $0xac] sm:$0xf]
        %v289 = vld [vmem:[#allocation5 + $0xb0] sm:$0xf]
        %v290 = vld [vmem:[#allocation5 + $0xb4] sm:$0xf]
        %v291 = vld [vmem:[#allocation5 + $0xb8] sm:$0xf]
        %v292 = vld [vmem:[#allocation5 + $0xbc] sm:$0xf]
        %v293 = vld [vmem:[#allocation5 + $0xc0] sm:$0xf]
        %v294 = vld [vmem:[#allocation5 + $0xc4] sm:$0xf]
        %v295 = vld [vmem:[#allocation5 + $0xc8] sm:$0xf]
        %v296 = vld [vmem:[#allocation5 + $0xcc] sm:$0xf]
        %v297 = vld [vmem:[#allocation5 + $0xd0] sm:$0xf]
        %v298 = vld [vmem:[#allocation5 + $0xd4] sm:$0xf]
        %v299 = vld [vmem:[#allocation5 + $0xd8] sm:$0xf]
        %v300 = vld [vmem:[#allocation5 + $0xdc] sm:$0xf]
        %v301 = vld [vmem:[#allocation5 + $0xe0] sm:$0xf]
        %v302 = vld [vmem:[#allocation5 + $0xe4] sm:$0xf]
        %v303 = vld [vmem:[#allocation5 + $0xe8] sm:$0xf]
        %v304 = vld [vmem:[#allocation5 + $0xec] sm:$0xf]
        %v305 = vld [vmem:[#allocation5 + $0xf0] sm:$0xf]
        %v306 = vld [vmem:[#allocation5 + $0xf4] sm:$0xf]
        %v307 = vld [vmem:[#allocation5 + $0xf8] sm:$0xf]
        %v308 = vld [vmem:[#allocation5 + $0xfc] sm:$0xf]
        %v373 = vunpack.c.l.b16 %v181
        %v374 = vunpack.c.h.b16 %v181
        %v375 = vunpack.c.l.b16 %v182
        %v376 = vunpack.c.h.b16 %v182
        %v377 = vunpack.c.l.b16 %v183
        %v378 = vunpack.c.h.b16 %v183
        %v379 = vunpack.c.l.b16 %v184
        %v380 = vunpack.c.h.b16 %v184
        %v381 = vunpack.c.l.b16 %v185
        %v382 = vunpack.c.h.b16 %v185
        %v383 = vunpack.c.l.b16 %v186
        %v384 = vunpack.c.h.b16 %v186
        %v385 = vunpack.c.l.b16 %v187
        %v386 = vunpack.c.h.b16 %v187
        %v387 = vunpack.c.l.b16 %v188
        %v388 = vunpack.c.h.b16 %v188
        %v389 = vunpack.c.l.b16 %v189
        %v390 = vunpack.c.h.b16 %v189
        %v391 = vunpack.c.l.b16 %v190
        %v392 = vunpack.c.h.b16 %v190
        %v393 = vunpack.c.l.b16 %v191
        %v394 = vunpack.c.h.b16 %v191
        %v395 = vunpack.c.l.b16 %v192
        %v396 = vunpack.c.h.b16 %v192
        %v397 = vunpack.c.l.b16 %v193
        %v398 = vunpack.c.h.b16 %v193
        %v399 = vunpack.c.l.b16 %v194
        %v400 = vunpack.c.h.b16 %v194
        %v401 = vunpack.c.l.b16 %v195
        %v402 = vunpack.c.h.b16 %v195
        %v403 = vunpack.c.l.b16 %v196
        %v404 = vunpack.c.h.b16 %v196
        %v405 = vunpack.c.l.b16 %v197
        %v406 = vunpack.c.h.b16 %v197
        %v407 = vunpack.c.l.b16 %v198
        %v408 = vunpack.c.h.b16 %v198
        %v409 = vunpack.c.l.b16 %v199
        %v410 = vunpack.c.h.b16 %v199
        %v411 = vunpack.c.l.b16 %v200
        %v412 = vunpack.c.h.b16 %v200
        %v413 = vunpack.c.l.b16 %v201
        %v414 = vunpack.c.h.b16 %v201
        %v415 = vunpack.c.l.b16 %v202
        %v416 = vunpack.c.h.b16 %v202
        %v417 = vunpack.c.l.b16 %v203
        %v418 = vunpack.c.h.b16 %v203
        %v419 = vunpack.c.l.b16 %v204
        %v420 = vunpack.c.h.b16 %v204
        %v421 = vunpack.c.l.b16 %v205
        %v422 = vunpack.c.h.b16 %v205
        %v423 = vunpack.c.l.b16 %v206
        %v424 = vunpack.c.h.b16 %v206
        %v425 = vunpack.c.l.b16 %v207
        %v426 = vunpack.c.h.b16 %v207
        %v427 = vunpack.c.l.b16 %v208
        %v428 = vunpack.c.h.b16 %v208
        %v429 = vunpack.c.l.b16 %v209
        %v430 = vunpack.c.h.b16 %v209
        %v431 = vunpack.c.l.b16 %v210
        %v432 = vunpack.c.h.b16 %v210
        %v433 = vunpack.c.l.b16 %v211
        %v434 = vunpack.c.h.b16 %v211
        %v435 = vunpack.c.l.b16 %v212
        %v436 = vunpack.c.h.b16 %v212
        %v437 = vunpack.c.l.b16 %v213
        %v438 = vunpack.c.h.b16 %v213
        %v439 = vunpack.c.l.b16 %v214
        %v440 = vunpack.c.h.b16 %v214
        %v441 = vunpack.c.l.b16 %v215
        %v442 = vunpack.c.h.b16 %v215
        %v443 = vunpack.c.l.b16 %v216
        %v444 = vunpack.c.h.b16 %v216
        %v445 = vunpack.c.l.b16 %v217
        %v446 = vunpack.c.h.b16 %v217
        %v447 = vunpack.c.l.b16 %v218
        %v448 = vunpack.c.h.b16 %v218
        %v449 = vunpack.c.l.b16 %v219
        %v450 = vunpack.c.h.b16 %v219
        %v451 = vunpack.c.l.b16 %v220
        %v452 = vunpack.c.h.b16 %v220
        %v453 = vunpack.c.l.b16 %v221
        %v454 = vunpack.c.h.b16 %v221
        %v455 = vunpack.c.l.b16 %v222
        %v456 = vunpack.c.h.b16 %v222
        %v457 = vunpack.c.l.b16 %v223
        %v458 = vunpack.c.h.b16 %v223
        %v459 = vunpack.c.l.b16 %v224
        %v460 = vunpack.c.h.b16 %v224
        %v461 = vunpack.c.l.b16 %v225
        %v462 = vunpack.c.h.b16 %v225
        %v463 = vunpack.c.l.b16 %v226
        %v464 = vunpack.c.h.b16 %v226
        %v465 = vunpack.c.l.b16 %v227
        %v466 = vunpack.c.h.b16 %v227
        %v467 = vunpack.c.l.b16 %v228
        %v468 = vunpack.c.h.b16 %v228
        %v469 = vunpack.c.l.b16 %v229
        %v470 = vunpack.c.h.b16 %v229
        %v471 = vunpack.c.l.b16 %v230
        %v472 = vunpack.c.h.b16 %v230
        %v473 = vunpack.c.l.b16 %v231
        %v474 = vunpack.c.h.b16 %v231
        %v475 = vunpack.c.l.b16 %v232
        %v476 = vunpack.c.h.b16 %v232
        %v477 = vunpack.c.l.b16 %v233
        %v478 = vunpack.c.h.b16 %v233
        %v479 = vunpack.c.l.b16 %v234
        %v480 = vunpack.c.h.b16 %v234
        %v481 = vunpack.c.l.b16 %v235
        %v482 = vunpack.c.h.b16 %v235
        %v483 = vunpack.c.l.b16 %v236
        %v484 = vunpack.c.h.b16 %v236
        %v485 = vunpack.c.l.b16 %v237
        %v486 = vunpack.c.h.b16 %v237
        %v487 = vunpack.c.l.b16 %v238
        %v488 = vunpack.c.h.b16 %v238
        %v489 = vunpack.c.l.b16 %v239
        %v490 = vunpack.c.h.b16 %v239
        %v491 = vunpack.c.l.b16 %v240
        %v492 = vunpack.c.h.b16 %v240
        %v493 = vunpack.c.l.b16 %v241
        %v494 = vunpack.c.h.b16 %v241
        %v495 = vunpack.c.l.b16 %v242
        %v496 = vunpack.c.h.b16 %v242
        %v497 = vunpack.c.l.b16 %v243
        %v498 = vunpack.c.h.b16 %v243
        %v499 = vunpack.c.l.b16 %v244
        %v500 = vunpack.c.h.b16 %v244
        %v501 = vpack.c.b16 %v377, %v373
        %v502 = vpack.c.b16 %v378, %v374
        %v503 = vpack.c.b16 %v379, %v375
        %v504 = vpack.c.b16 %v380, %v376
        %v505 = vpack.c.b16 %v385, %v381
        %v506 = vpack.c.b16 %v386, %v382
        %v507 = vpack.c.b16 %v387, %v383
        %v508 = vpack.c.b16 %v388, %v384
        %v509 = vpack.c.b16 %v393, %v389
        %v510 = vpack.c.b16 %v394, %v390
        %v511 = vpack.c.b16 %v395, %v391
        %v512 = vpack.c.b16 %v396, %v392
        %v513 = vpack.c.b16 %v401, %v397
        %v514 = vpack.c.b16 %v402, %v398
        %v515 = vpack.c.b16 %v403, %v399
        %v516 = vpack.c.b16 %v404, %v400
        %v517 = vpack.c.b16 %v409, %v405
        %v518 = vpack.c.b16 %v410, %v406
        %v519 = vpack.c.b16 %v411, %v407
        %v520 = vpack.c.b16 %v412, %v408
        %v521 = vpack.c.b16 %v417, %v413
        %v522 = vpack.c.b16 %v418, %v414
        %v523 = vpack.c.b16 %v419, %v415
        %v524 = vpack.c.b16 %v420, %v416
        %v525 = vpack.c.b16 %v425, %v421
        %v526 = vpack.c.b16 %v426, %v422
        %v527 = vpack.c.b16 %v427, %v423
        %v528 = vpack.c.b16 %v428, %v424
        %v529 = vpack.c.b16 %v433, %v429
        %v530 = vpack.c.b16 %v434, %v430
        %v531 = vpack.c.b16 %v435, %v431
        %v532 = vpack.c.b16 %v436, %v432
        %v533 = vpack.c.b16 %v441, %v437
        %v534 = vpack.c.b16 %v442, %v438
        %v535 = vpack.c.b16 %v443, %v439
        %v536 = vpack.c.b16 %v444, %v440
        %v537 = vpack.c.b16 %v449, %v445
        %v538 = vpack.c.b16 %v450, %v446
        %v539 = vpack.c.b16 %v451, %v447
        %v540 = vpack.c.b16 %v452, %v448
        %v541 = vpack.c.b16 %v457, %v453
        %v542 = vpack.c.b16 %v458, %v454
        %v543 = vpack.c.b16 %v459, %v455
        %v544 = vpack.c.b16 %v460, %v456
        %v545 = vpack.c.b16 %v465, %v461
        %v546 = vpack.c.b16 %v466, %v462
        %v547 = vpack.c.b16 %v467, %v463
        %v548 = vpack.c.b16 %v468, %v464
        %v549 = vpack.c.b16 %v473, %v469
        %v550 = vpack.c.b16 %v474, %v470
        %v551 = vpack.c.b16 %v475, %v471
        %v552 = vpack.c.b16 %v476, %v472
        %v553 = vpack.c.b16 %v481, %v477
        %v554 = vpack.c.b16 %v482, %v478
        %v555 = vpack.c.b16 %v483, %v479
        %v556 = vpack.c.b16 %v484, %v480
        %v557 = vpack.c.b16 %v489, %v485
        %v558 = vpack.c.b16 %v490, %v486
        %v559 = vpack.c.b16 %v491, %v487
        %v560 = vpack.c.b16 %v492, %v488
        %v561 = vpack.c.b16 %v497, %v493
        %v562 = vpack.c.b16 %v498, %v494
        %v563 = vpack.c.b16 %v499, %v495
        %v564 = vpack.c.b16 %v500, %v496
        %v693 = vunpack.c.l.b16 %v245
        %v694 = vunpack.c.l.b16 %v246
        %v695 = vunpack.c.l.b16 %v247
        %v696 = vunpack.c.l.b16 %v248
        %v697 = vunpack.c.l.b16 %v249
        %v698 = vunpack.c.l.b16 %v250
        %v699 = vunpack.c.l.b16 %v251
        %v700 = vunpack.c.l.b16 %v252
        %v701 = vunpack.c.l.b16 %v253
        %v702 = vunpack.c.l.b16 %v254
        %v703 = vunpack.c.l.b16 %v255
        %v704 = vunpack.c.l.b16 %v256
        %v705 = vunpack.c.l.b16 %v257
        %v706 = vunpack.c.l.b16 %v258
        %v707 = vunpack.c.l.b16 %v259
        %v708 = vunpack.c.l.b16 %v260
        %v709 = vunpack.c.l.b16 %v261
        %v710 = vunpack.c.l.b16 %v262
        %v711 = vunpack.c.l.b16 %v263
        %v712 = vunpack.c.l.b16 %v264
        %v713 = vunpack.c.l.b16 %v265
        %v714 = vunpack.c.l.b16 %v266
        %v715 = vunpack.c.l.b16 %v267
        %v716 = vunpack.c.l.b16 %v268
        %v717 = vunpack.c.l.b16 %v269
        %v718 = vunpack.c.l.b16 %v270
        %v719 = vunpack.c.l.b16 %v271
        %v720 = vunpack.c.l.b16 %v272
        %v721 = vunpack.c.l.b16 %v273
        %v722 = vunpack.c.l.b16 %v274
        %v723 = vunpack.c.l.b16 %v275
        %v724 = vunpack.c.l.b16 %v276
        %v725 = vunpack.c.l.b16 %v277
        %v726 = vunpack.c.l.b16 %v278
        %v727 = vunpack.c.l.b16 %v279
        %v728 = vunpack.c.l.b16 %v280
        %v729 = vunpack.c.l.b16 %v281
        %v730 = vunpack.c.l.b16 %v282
        %v731 = vunpack.c.l.b16 %v283
        %v732 = vunpack.c.l.b16 %v284
        %v733 = vunpack.c.l.b16 %v285
        %v734 = vunpack.c.l.b16 %v286
        %v735 = vunpack.c.l.b16 %v287
        %v736 = vunpack.c.l.b16 %v288
        %v737 = vunpack.c.l.b16 %v289
        %v738 = vunpack.c.l.b16 %v290
        %v739 = vunpack.c.l.b16 %v291
        %v740 = vunpack.c.l.b16 %v292
        %v741 = vunpack.c.l.b16 %v293
        %v742 = vunpack.c.l.b16 %v294
        %v743 = vunpack.c.l.b16 %v295
        %v744 = vunpack.c.l.b16 %v296
        %v745 = vunpack.c.l.b16 %v297
        %v746 = vunpack.c.l.b16 %v298
        %v747 = vunpack.c.l.b16 %v299
        %v748 = vunpack.c.l.b16 %v300
        %v749 = vunpack.c.l.b16 %v301
        %v750 = vunpack.c.l.b16 %v302
        %v751 = vunpack.c.l.b16 %v303
        %v752 = vunpack.c.l.b16 %v304
        %v753 = vunpack.c.l.b16 %v305
        %v754 = vunpack.c.l.b16 %v306
        %v755 = vunpack.c.l.b16 %v307
        %v756 = vunpack.c.l.b16 %v308
        %v757 = vpack.c.b16 %v694, %v693
        %v758 = vpack.c.b16 %v696, %v695
        %v759 = vpack.c.b16 %v698, %v697
        %v760 = vpack.c.b16 %v700, %v699
        %v761 = vpack.c.b16 %v702, %v701
        %v762 = vpack.c.b16 %v704, %v703
        %v763 = vpack.c.b16 %v706, %v705
        %v764 = vpack.c.b16 %v708, %v707
        %v765 = vpack.c.b16 %v710, %v709
        %v766 = vpack.c.b16 %v712, %v711
        %v767 = vpack.c.b16 %v714, %v713
        %v768 = vpack.c.b16 %v716, %v715
        %v769 = vpack.c.b16 %v718, %v717
        %v770 = vpack.c.b16 %v720, %v719
        %v771 = vpack.c.b16 %v722, %v721
        %v772 = vpack.c.b16 %v724, %v723
        %v773 = vpack.c.b16 %v726, %v725
        %v774 = vpack.c.b16 %v728, %v727
        %v775 = vpack.c.b16 %v730, %v729
        %v776 = vpack.c.b16 %v732, %v731
        %v777 = vpack.c.b16 %v734, %v733
        %v778 = vpack.c.b16 %v736, %v735
        %v779 = vpack.c.b16 %v738, %v737
        %v780 = vpack.c.b16 %v740, %v739
        %v781 = vpack.c.b16 %v742, %v741
        %v782 = vpack.c.b16 %v744, %v743
        %v783 = vpack.c.b16 %v746, %v745
        %v784 = vpack.c.b16 %v748, %v747
        %v785 = vpack.c.b16 %v750, %v749
        %v786 = vpack.c.b16 %v752, %v751
        %v787 = vpack.c.b16 %v754, %v753
        %v788 = vpack.c.b16 %v756, %v755
        %821 = vmatprep.subr.bf16.mxu0 0
        %822 = vmatpush1.bf16.msra.mxu0 %v757
        %823 = vmatprep.subr.bf16.mxu0 0
        %824 = vmatpush1.bf16.msra.mxu0 %v758
        %825 = vmatprep.subr.bf16.mxu0 0
        %826 = vmatpush1.bf16.msra.mxu0 %v759
        %827 = vmatprep.subr.bf16.mxu0 0
        %828 = vmatpush1.bf16.msra.mxu0 %v760
        %829 = vmatprep.subr.bf16.mxu0 0
        %830 = vmatpush1.bf16.msra.mxu0 %v761
        %831 = vmatprep.subr.bf16.mxu0 0
        %832 = vmatpush1.bf16.msra.mxu0 %v762
        %833 = vmatprep.subr.bf16.mxu0 0
        %834 = vmatpush1.bf16.msra.mxu0 %v763
        %835 = vmatprep.subr.bf16.mxu0 0
        %836 = vmatpush1.bf16.msra.mxu0 %v764
        %837 = vmatprep.subr.bf16.mxu0 0
        %838 = vmatpush1.bf16.msra.mxu0 %v765
        %839 = vmatprep.subr.bf16.mxu0 0
        %840 = vmatpush1.bf16.msra.mxu0 %v766
        %841 = vmatprep.subr.bf16.mxu0 0
        %842 = vmatpush1.bf16.msra.mxu0 %v767
        %843 = vmatprep.subr.bf16.mxu0 0
        %844 = vmatpush1.bf16.msra.mxu0 %v768
        %845 = vmatprep.subr.bf16.mxu0 0
        %846 = vmatpush1.bf16.msra.mxu0 %v769
        %847 = vmatprep.subr.bf16.mxu0 0
        %848 = vmatpush1.bf16.msra.mxu0 %v770
        %849 = vmatprep.subr.bf16.mxu0 0
        %850 = vmatpush1.bf16.msra.mxu0 %v771
        %851 = vmatprep.subr.bf16.mxu0 0
        %852 = vmatpush1.bf16.msra.mxu0 %v772
        %853 = vmatprep.mubr.bf16.mxu0 %v502
        %854 = vmatmul.mubr.bf16.gmra.mrb[0].mxu0 %v501
        %v855 = vpop.f32.mrb[0].mxu0
        %v856 = vadd.f32 0.0, %v855
        %v857 = vpop.f32.mrb[0].mxu0
        %v858 = vpop.f32.mrb[0].mxu0
        %v859 = vadd.f32 0.0, %v858
        %v860 = vpop.f32.mrb[0].mxu0
        %861 = vmatprep.mubr.bf16.mxu0 %v506
        %862 = vmatmul.mubr.bf16.gmra.mrb[0].mxu0 %v505
        %v863 = vpop.f32.mrb[0].mxu0
        %v864 = vadd.f32 0.0, %v863
        %v865 = vpop.f32.mrb[0].mxu0
        %v866 = vpop.f32.mrb[0].mxu0
        %v867 = vadd.f32 0.0, %v866
        %v868 = vpop.f32.mrb[0].mxu0
        %869 = vmatprep.mubr.bf16.mxu0 %v510
        %870 = vmatmul.mubr.bf16.gmra.mrb[0].mxu0 %v509
        %v871 = vpop.f32.mrb[0].mxu0
        %v872 = vadd.f32 0.0, %v871
        %v873 = vpop.f32.mrb[0].mxu0
        %v874 = vpop.f32.mrb[0].mxu0
        %v875 = vadd.f32 0.0, %v874
        %v876 = vpop.f32.mrb[0].mxu0
        %877 = vmatprep.mubr.bf16.mxu0 %v514
        %878 = vmatmul.mubr.bf16.gmra.mrb[0].mxu0 %v513
        %v879 = vpop.f32.mrb[0].mxu0
        %v880 = vadd.f32 0.0, %v879
        %v881 = vpop.f32.mrb[0].mxu0
        %v882 = vpop.f32.mrb[0].mxu0
        %v883 = vadd.f32 0.0, %v882
        %v884 = vpop.f32.mrb[0].mxu0
        %885 = vmatprep.mubr.bf16.mxu0 %v518
        %886 = vmatmul.mubr.bf16.gmra.mrb[0].mxu0 %v517
        %v887 = vpop.f32.mrb[0].mxu0
        %v888 = vadd.f32 0.0, %v887
        %v889 = vpop.f32.mrb[0].mxu0
        %v890 = vpop.f32.mrb[0].mxu0
        %v891 = vadd.f32 0.0, %v890
        %v892 = vpop.f32.mrb[0].mxu0
        %893 = vmatprep.mubr.bf16.mxu0 %v522
        %894 = vmatmul.mubr.bf16.gmra.mrb[0].mxu0 %v521
        %v895 = vpop.f32.mrb[0].mxu0
        %v896 = vadd.f32 0.0, %v895
        %v897 = vpop.f32.mrb[0].mxu0
        %v898 = vpop.f32.mrb[0].mxu0
        %v899 = vadd.f32 0.0, %v898
        %v900 = vpop.f32.mrb[0].mxu0
        %901 = vmatprep.mubr.bf16.mxu0 %v526
        %902 = vmatmul.mubr.bf16.gmra.mrb[0].mxu0 %v525
        %v903 = vpop.f32.mrb[0].mxu0
        %v904 = vadd.f32 0.0, %v903
        %v905 = vpop.f32.mrb[0].mxu0
        %v906 = vpop.f32.mrb[0].mxu0
        %v907 = vadd.f32 0.0, %v906
        %v908 = vpop.f32.mrb[0].mxu0
        %909 = vmatprep.mubr.bf16.mxu0 %v530
        %910 = vmatmul.mubr.bf16.gmra.mrb[0].mxu0 %v529
        %v911 = vpop.f32.mrb[0].mxu0
        %v912 = vadd.f32 0.0, %v911
        %v913 = vpop.f32.mrb[0].mxu0
        %v914 = vpop.f32.mrb[0].mxu0
        %v915 = vadd.f32 0.0, %v914
        %v916 = vpop.f32.mrb[0].mxu0
        %917 = vmatprep.mubr.bf16.mxu0 %v534
        %918 = vmatmul.mubr.bf16.gmra.mrb[0].mxu0 %v533
        %v919 = vpop.f32.mrb[0].mxu0
        %v920 = vadd.f32 0.0, %v919
        %v921 = vpop.f32.mrb[0].mxu0
        %v922 = vpop.f32.mrb[0].mxu0
        %v923 = vadd.f32 0.0, %v922
        %v924 = vpop.f32.mrb[0].mxu0
        %925 = vmatprep.mubr.bf16.mxu0 %v538
        %926 = vmatmul.mubr.bf16.gmra.mrb[0].mxu0 %v537
        %v927 = vpop.f32.mrb[0].mxu0
        %v928 = vadd.f32 0.0, %v927
        %v929 = vpop.f32.mrb[0].mxu0
        %v930 = vpop.f32.mrb[0].mxu0
        %v931 = vadd.f32 0.0, %v930
        %v932 = vpop.f32.mrb[0].mxu0
        %933 = vmatprep.mubr.bf16.mxu0 %v542
        %934 = vmatmul.mubr.bf16.gmra.mrb[0].mxu0 %v541
        %v935 = vpop.f32.mrb[0].mxu0
        %v936 = vadd.f32 0.0, %v935
        %v937 = vpop.f32.mrb[0].mxu0
        %v938 = vpop.f32.mrb[0].mxu0
        %v939 = vadd.f32 0.0, %v938
        %v940 = vpop.f32.mrb[0].mxu0
        %941 = vmatprep.mubr.bf16.mxu0 %v546
        %942 = vmatmul.mubr.bf16.gmra.mrb[0].mxu0 %v545
        %v943 = vpop.f32.mrb[0].mxu0
        %v944 = vadd.f32 0.0, %v943
        %v945 = vpop.f32.mrb[0].mxu0
        %v946 = vpop.f32.mrb[0].mxu0
        %v947 = vadd.f32 0.0, %v946
        %v948 = vpop.f32.mrb[0].mxu0
        %949 = vmatprep.mubr.bf16.mxu0 %v550
        %950 = vmatmul.mubr.bf16.gmra.mrb[0].mxu0 %v549
        %v951 = vpop.f32.mrb[0].mxu0
        %v952 = vadd.f32 0.0, %v951
        %v953 = vpop.f32.mrb[0].mxu0
        %v954 = vpop.f32.mrb[0].mxu0
        %v955 = vadd.f32 0.0, %v954
        %v956 = vpop.f32.mrb[0].mxu0
        %957 = vmatprep.mubr.bf16.mxu0 %v554
        %958 = vmatmul.mubr.bf16.gmra.mrb[0].mxu0 %v553
        %v959 = vpop.f32.mrb[0].mxu0
        %v960 = vadd.f32 0.0, %v959
        %v961 = vpop.f32.mrb[0].mxu0
        %v962 = vpop.f32.mrb[0].mxu0
        %v963 = vadd.f32 0.0, %v962
        %v964 = vpop.f32.mrb[0].mxu0
        %965 = vmatprep.mubr.bf16.mxu0 %v558
        %966 = vmatmul.mubr.bf16.gmra.mrb[0].mxu0 %v557
        %v967 = vpop.f32.mrb[0].mxu0
        %v968 = vadd.f32 0.0, %v967
        %v969 = vpop.f32.mrb[0].mxu0
        %v970 = vpop.f32.mrb[0].mxu0
        %v971 = vadd.f32 0.0, %v970
        %v972 = vpop.f32.mrb[0].mxu0
        %973 = vmatprep.mubr.bf16.mxu0 %v562
        %974 = vmatmul.mubr.bf16.gmra.mrb[0].mxu0 %v561
        %v975 = vpop.f32.mrb[0].mxu0
        %v976 = vadd.f32 0.0, %v975
        %v977 = vpop.f32.mrb[0].mxu0
        %v978 = vpop.f32.mrb[0].mxu0
        %v979 = vadd.f32 0.0, %v978
        %v980 = vpop.f32.mrb[0].mxu0
        %981 = vdwg.mxu0
        %982 = vmatprep.subr.bf16.mxu0 0
        %983 = vmatpush1.bf16.msra.mxu0 %v773
        %984 = vmatprep.subr.bf16.mxu0 0
        %985 = vmatpush1.bf16.msra.mxu0 %v774
        %986 = vmatprep.subr.bf16.mxu0 0
        %987 = vmatpush1.bf16.msra.mxu0 %v775
        %988 = vmatprep.subr.bf16.mxu0 0
        %989 = vmatpush1.bf16.msra.mxu0 %v776
        %990 = vmatprep.subr.bf16.mxu0 0
        %991 = vmatpush1.bf16.msra.mxu0 %v777
        %992 = vmatprep.subr.bf16.mxu0 0
        %993 = vmatpush1.bf16.msra.mxu0 %v778
        %994 = vmatprep.subr.bf16.mxu0 0
        %995 = vmatpush1.bf16.msra.mxu0 %v779
        %996 = vmatprep.subr.bf16.mxu0 0
        %997 = vmatpush1.bf16.msra.mxu0 %v780
        %998 = vmatprep.subr.bf16.mxu0 0
        %999 = vmatpush1.bf16.msra.mxu0 %v781
        %1000 = vmatprep.subr.bf16.mxu0 0
        %1001 = vmatpush1.bf16.msra.mxu0 %v782
        %1002 = vmatprep.subr.bf16.mxu0 0
        %1003 = vmatpush1.bf16.msra.mxu0 %v783
        %1004 = vmatprep.subr.bf16.mxu0 0
        %1005 = vmatpush1.bf16.msra.mxu0 %v784
        %1006 = vmatprep.subr.bf16.mxu0 0
        %1007 = vmatpush1.bf16.msra.mxu0 %v785
        %1008 = vmatprep.subr.bf16.mxu0 0
        %1009 = vmatpush1.bf16.msra.mxu0 %v786
        %1010 = vmatprep.subr.bf16.mxu0 0
        %1011 = vmatpush1.bf16.msra.mxu0 %v787
        %1012 = vmatprep.subr.bf16.mxu0 0
        %1013 = vmatpush1.bf16.msra.mxu0 %v788
        %1014 = vmatprep.mubr.bf16.mxu0 %v504
        %1015 = vmatmul.mubr.bf16.gmra.mrb[0].mxu0 %v503
        %v1016 = vpop.f32.mrb[0].mxu0
        %v1017 = vadd.f32 %v856, %v1016
        %v1018 = vpop.f32.mrb[0].mxu0
        %v1019 = vpop.f32.mrb[0].mxu0
        %v1020 = vadd.f32 %v859, %v1019
        %v1021 = vpop.f32.mrb[0].mxu0
        %1022 = vmatprep.mubr.bf16.mxu0 %v508
        %1023 = vmatmul.mubr.bf16.gmra.mrb[0].mxu0 %v507
        %v1024 = vpop.f32.mrb[0].mxu0
        %v1025 = vadd.f32 %v864, %v1024
        %v1026 = vpop.f32.mrb[0].mxu0
        %v1027 = vpop.f32.mrb[0].mxu0
        %v1028 = vadd.f32 %v867, %v1027
        %v1029 = vpop.f32.mrb[0].mxu0
        %1030 = vmatprep.mubr.bf16.mxu0 %v512
        %1031 = vmatmul.mubr.bf16.gmra.mrb[0].mxu0 %v511
        %v1032 = vpop.f32.mrb[0].mxu0
        %v1033 = vadd.f32 %v872, %v1032
        %v1034 = vpop.f32.mrb[0].mxu0
        %v1035 = vpop.f32.mrb[0].mxu0
        %v1036 = vadd.f32 %v875, %v1035
        %v1037 = vpop.f32.mrb[0].mxu0
        %1038 = vmatprep.mubr.bf16.mxu0 %v516
        %1039 = vmatmul.mubr.bf16.gmra.mrb[0].mxu0 %v515
        %v1040 = vpop.f32.mrb[0].mxu0
        %v1041 = vadd.f32 %v880, %v1040
        %v1042 = vpop.f32.mrb[0].mxu0
        %v1043 = vpop.f32.mrb[0].mxu0
        %v1044 = vadd.f32 %v883, %v1043
        %v1045 = vpop.f32.mrb[0].mxu0
        %1046 = vmatprep.mubr.bf16.mxu0 %v520
        %1047 = vmatmul.mubr.bf16.gmra.mrb[0].mxu0 %v519
        %v1048 = vpop.f32.mrb[0].mxu0
        %v1049 = vadd.f32 %v888, %v1048
        %v1050 = vpop.f32.mrb[0].mxu0
        %v1051 = vpop.f32.mrb[0].mxu0
        %v1052 = vadd.f32 %v891, %v1051
        %v1053 = vpop.f32.mrb[0].mxu0
        %1054 = vmatprep.mubr.bf16.mxu0 %v524
        %1055 = vmatmul.mubr.bf16.gmra.mrb[0].mxu0 %v523
        %v1056 = vpop.f32.mrb[0].mxu0
        %v1057 = vadd.f32 %v896, %v1056
        %v1058 = vpop.f32.mrb[0].mxu0
        %v1059 = vpop.f32.mrb[0].mxu0
        %v1060 = vadd.f32 %v899, %v1059
        %v1061 = vpop.f32.mrb[0].mxu0
        %1062 = vmatprep.mubr.bf16.mxu0 %v528
        %1063 = vmatmul.mubr.bf16.gmra.mrb[0].mxu0 %v527
        %v1064 = vpop.f32.mrb[0].mxu0
        %v1065 = vadd.f32 %v904, %v1064
        %v1066 = vpop.f32.mrb[0].mxu0
        %v1067 = vpop.f32.mrb[0].mxu0
        %v1068 = vadd.f32 %v907, %v1067
        %v1069 = vpop.f32.mrb[0].mxu0
        %1070 = vmatprep.mubr.bf16.mxu0 %v532
        %1071 = vmatmul.mubr.bf16.gmra.mrb[0].mxu0 %v531
        %v1072 = vpop.f32.mrb[0].mxu0
        %v1073 = vadd.f32 %v912, %v1072
        %v1074 = vpop.f32.mrb[0].mxu0
        %v1075 = vpop.f32.mrb[0].mxu0
        %v1076 = vadd.f32 %v915, %v1075
        %v1077 = vpop.f32.mrb[0].mxu0
        %1078 = vmatprep.mubr.bf16.mxu0 %v536
        %1079 = vmatmul.mubr.bf16.gmra.mrb[0].mxu0 %v535
        %v1080 = vpop.f32.mrb[0].mxu0
        %v1081 = vadd.f32 %v920, %v1080
        %v1082 = vpop.f32.mrb[0].mxu0
        %v1083 = vpop.f32.mrb[0].mxu0
        %v1084 = vadd.f32 %v923, %v1083
        %v1085 = vpop.f32.mrb[0].mxu0
        %1086 = vmatprep.mubr.bf16.mxu0 %v540
        %1087 = vmatmul.mubr.bf16.gmra.mrb[0].mxu0 %v539
        %v1088 = vpop.f32.mrb[0].mxu0
        %v1089 = vadd.f32 %v928, %v1088
        %v1090 = vpop.f32.mrb[0].mxu0
        %v1091 = vpop.f32.mrb[0].mxu0
        %v1092 = vadd.f32 %v931, %v1091
        %v1093 = vpop.f32.mrb[0].mxu0
        %1094 = vmatprep.mubr.bf16.mxu0 %v544
        %1095 = vmatmul.mubr.bf16.gmra.mrb[0].mxu0 %v543
        %v1096 = vpop.f32.mrb[0].mxu0
        %v1097 = vadd.f32 %v936, %v1096
        %v1098 = vpop.f32.mrb[0].mxu0
        %v1099 = vpop.f32.mrb[0].mxu0
        %v1100 = vadd.f32 %v939, %v1099
        %v1101 = vpop.f32.mrb[0].mxu0
        %1102 = vmatprep.mubr.bf16.mxu0 %v548
        %1103 = vmatmul.mubr.bf16.gmra.mrb[0].mxu0 %v547
        %v1104 = vpop.f32.mrb[0].mxu0
        %v1105 = vadd.f32 %v944, %v1104
        %v1106 = vpop.f32.mrb[0].mxu0
        %v1107 = vpop.f32.mrb[0].mxu0
        %v1108 = vadd.f32 %v947, %v1107
        %v1109 = vpop.f32.mrb[0].mxu0
        %1110 = vmatprep.mubr.bf16.mxu0 %v552
        %1111 = vmatmul.mubr.bf16.gmra.mrb[0].mxu0 %v551
        %v1112 = vpop.f32.mrb[0].mxu0
        %v1113 = vadd.f32 %v952, %v1112
        %v1114 = vpop.f32.mrb[0].mxu0
        %v1115 = vpop.f32.mrb[0].mxu0
        %v1116 = vadd.f32 %v955, %v1115
        %v1117 = vpop.f32.mrb[0].mxu0
        %1118 = vmatprep.mubr.bf16.mxu0 %v556
        %1119 = vmatmul.mubr.bf16.gmra.mrb[0].mxu0 %v555
        %v1120 = vpop.f32.mrb[0].mxu0
        %v1121 = vadd.f32 %v960, %v1120
        %v1122 = vpop.f32.mrb[0].mxu0
        %v1123 = vpop.f32.mrb[0].mxu0
        %v1124 = vadd.f32 %v963, %v1123
        %v1125 = vpop.f32.mrb[0].mxu0
        %1126 = vmatprep.mubr.bf16.mxu0 %v560
        %1127 = vmatmul.mubr.bf16.gmra.mrb[0].mxu0 %v559
        %v1128 = vpop.f32.mrb[0].mxu0
        %v1129 = vadd.f32 %v968, %v1128
        %v1130 = vpop.f32.mrb[0].mxu0
        %v1131 = vpop.f32.mrb[0].mxu0
        %v1132 = vadd.f32 %v971, %v1131
        %v1133 = vpop.f32.mrb[0].mxu0
        %1134 = vmatprep.mubr.bf16.mxu0 %v564
        %1135 = vmatmul.mubr.bf16.gmra.mrb[0].mxu0 %v563
        %v1136 = vpop.f32.mrb[0].mxu0
        %v1137 = vadd.f32 %v976, %v1136
        %v1138 = vpop.f32.mrb[0].mxu0
        %v1139 = vpop.f32.mrb[0].mxu0
        %v1140 = vadd.f32 %v979, %v1139
        %v1141 = vpop.f32.mrb[0].mxu0
        %1142 = vdwg.mxu0
        %v1143 = vmul.f32 %v1017, %v1017
        %v1144 = vmul.f32 %v1020, %v1020
        %v1145 = vmul.f32 %v1025, %v1025
        %v1146 = vmul.f32 %v1028, %v1028
        %v1147 = vmul.f32 %v1033, %v1033
        %v1148 = vmul.f32 %v1036, %v1036
        %v1149 = vmul.f32 %v1041, %v1041
        %v1150 = vmul.f32 %v1044, %v1044
        %v1151 = vmul.f32 %v1049, %v1049
        %v1152 = vmul.f32 %v1052, %v1052
        %v1153 = vmul.f32 %v1057, %v1057
        %v1154 = vmul.f32 %v1060, %v1060
        %v1155 = vmul.f32 %v1065, %v1065
        %v1156 = vmul.f32 %v1068, %v1068
        %v1157 = vmul.f32 %v1073, %v1073
        %v1158 = vmul.f32 %v1076, %v1076
        %v1159 = vmul.f32 %v1081, %v1081
        %v1160 = vmul.f32 %v1084, %v1084
        %v1161 = vmul.f32 %v1089, %v1089
        %v1162 = vmul.f32 %v1092, %v1092
        %v1163 = vmul.f32 %v1097, %v1097
        %v1164 = vmul.f32 %v1100, %v1100
        %v1165 = vmul.f32 %v1105, %v1105
        %v1166 = vmul.f32 %v1108, %v1108
        %v1167 = vmul.f32 %v1113, %v1113
        %v1168 = vmul.f32 %v1116, %v1116
        %v1169 = vmul.f32 %v1121, %v1121
        %v1170 = vmul.f32 %v1124, %v1124
        %v1171 = vmul.f32 %v1129, %v1129
        %v1172 = vmul.f32 %v1132, %v1132
        %v1173 = vmul.f32 %v1137, %v1137
        %v1174 = vmul.f32 %v1140, %v1140
        %1175 = vadd.xlane.f32.xlu0 %v1143
        %v1176 = vpop.xlane.xlu0 %1175
        %1177 = vadd.xlane.f32.xlu0 %v1144
        %v1178 = vpop.xlane.xlu0 %1177
        %1179 = vadd.xlane.f32.xlu0 %v1145
        %v1180 = vpop.xlane.xlu0 %1179
        %1181 = vadd.xlane.f32.xlu0 %v1146
        %v1182 = vpop.xlane.xlu0 %1181
        %1183 = vadd.xlane.f32.xlu0 %v1147
        %v1184 = vpop.xlane.xlu0 %1183
        %1185 = vadd.xlane.f32.xlu0 %v1148
        %v1186 = vpop.xlane.xlu0 %1185
        %1187 = vadd.xlane.f32.xlu0 %v1149
        %v1188 = vpop.xlane.xlu0 %1187
        %1189 = vadd.xlane.f32.xlu0 %v1150
        %v1190 = vpop.xlane.xlu0 %1189
        %1191 = vadd.xlane.f32.xlu0 %v1151
        %v1192 = vpop.xlane.xlu0 %1191
        %1193 = vadd.xlane.f32.xlu0 %v1152
        %v1194 = vpop.xlane.xlu0 %1193
        %1195 = vadd.xlane.f32.xlu0 %v1153
        %v1196 = vpop.xlane.xlu0 %1195
        %1197 = vadd.xlane.f32.xlu0 %v1154
        %v1198 = vpop.xlane.xlu0 %1197
        %1199 = vadd.xlane.f32.xlu0 %v1155
        %v1200 = vpop.xlane.xlu0 %1199
        %1201 = vadd.xlane.f32.xlu0 %v1156
        %v1202 = vpop.xlane.xlu0 %1201
        %1203 = vadd.xlane.f32.xlu0 %v1157
        %v1204 = vpop.xlane.xlu0 %1203
        %1205 = vadd.xlane.f32.xlu0 %v1158
        %v1206 = vpop.xlane.xlu0 %1205
        %1207 = vadd.xlane.f32.xlu0 %v1159
        %v1208 = vpop.xlane.xlu0 %1207
        %1209 = vadd.xlane.f32.xlu0 %v1160
        %v1210 = vpop.xlane.xlu0 %1209
        %1211 = vadd.xlane.f32.xlu0 %v1161
        %v1212 = vpop.xlane.xlu0 %1211
        %1213 = vadd.xlane.f32.xlu0 %v1162
        %v1214 = vpop.xlane.xlu0 %1213
        %1215 = vadd.xlane.f32.xlu0 %v1163
        %v1216 = vpop.xlane.xlu0 %1215
        %1217 = vadd.xlane.f32.xlu0 %v1164
        %v1218 = vpop.xlane.xlu0 %1217
        %1219 = vadd.xlane.f32.xlu0 %v1165
        %v1220 = vpop.xlane.xlu0 %1219
        %1221 = vadd.xlane.f32.xlu0 %v1166
        %v1222 = vpop.xlane.xlu0 %1221
        %1223 = vadd.xlane.f32.xlu0 %v1167
        %v1224 = vpop.xlane.xlu0 %1223
        %1225 = vadd.xlane.f32.xlu0 %v1168
        %v1226 = vpop.xlane.xlu0 %1225
        %1227 = vadd.xlane.f32.xlu0 %v1169
        %v1228 = vpop.xlane.xlu0 %1227
        %1229 = vadd.xlane.f32.xlu0 %v1170
        %v1230 = vpop.xlane.xlu0 %1229
        %1231 = vadd.xlane.f32.xlu0 %v1171
        %v1232 = vpop.xlane.xlu0 %1231
        %1233 = vadd.xlane.f32.xlu0 %v1172
        %v1234 = vpop.xlane.xlu0 %1233
        %1235 = vadd.xlane.f32.xlu0 %v1173
        %v1236 = vpop.xlane.xlu0 %1235
        %1237 = vadd.xlane.f32.xlu0 %v1174
        %v1238 = vpop.xlane.xlu0 %1237
        %v1239 = vmul.f32 %v1143, 2.0
        %v1240 = vmul.f32 %v1144, 2.0
        %v1241 = vmul.f32 %v1145, 2.0
        %v1242 = vmul.f32 %v1146, 2.0
        %v1243 = vmul.f32 %v1147, 2.0
        %v1244 = vmul.f32 %v1148, 2.0
        %v1245 = vmul.f32 %v1149, 2.0
        %v1246 = vmul.f32 %v1150, 2.0
        %v1247 = vmul.f32 %v1151, 2.0
        %v1248 = vmul.f32 %v1152, 2.0
        %v1249 = vmul.f32 %v1153, 2.0
        %v1250 = vmul.f32 %v1154, 2.0
        %v1251 = vmul.f32 %v1155, 2.0
        %v1252 = vmul.f32 %v1156, 2.0
        %v1253 = vmul.f32 %v1157, 2.0
        %v1254 = vmul.f32 %v1158, 2.0
        %v1255 = vmul.f32 %v1159, 2.0
        %v1256 = vmul.f32 %v1160, 2.0
        %v1257 = vmul.f32 %v1161, 2.0
        %v1258 = vmul.f32 %v1162, 2.0
        %v1259 = vmul.f32 %v1163, 2.0
        %v1260 = vmul.f32 %v1164, 2.0
        %v1261 = vmul.f32 %v1165, 2.0
        %v1262 = vmul.f32 %v1166, 2.0
        %v1263 = vmul.f32 %v1167, 2.0
        %v1264 = vmul.f32 %v1168, 2.0
        %v1265 = vmul.f32 %v1169, 2.0
        %v1266 = vmul.f32 %v1170, 2.0
        %v1267 = vmul.f32 %v1171, 2.0
        %v1268 = vmul.f32 %v1172, 2.0
        %v1269 = vmul.f32 %v1173, 2.0
        %v1270 = vmul.f32 %v1174, 2.0
        %v1271 = vsub.f32 %v1176, %v1239
        %v1272 = vsub.f32 %v1178, %v1240
        %v1273 = vsub.f32 %v1180, %v1241
        %v1274 = vsub.f32 %v1182, %v1242
        %v1275 = vsub.f32 %v1184, %v1243
        %v1276 = vsub.f32 %v1186, %v1244
        %v1277 = vsub.f32 %v1188, %v1245
        %v1278 = vsub.f32 %v1190, %v1246
        %v1279 = vsub.f32 %v1192, %v1247
        %v1280 = vsub.f32 %v1194, %v1248
        %v1281 = vsub.f32 %v1196, %v1249
        %v1282 = vsub.f32 %v1198, %v1250
        %v1283 = vsub.f32 %v1200, %v1251
        %v1284 = vsub.f32 %v1202, %v1252
        %v1285 = vsub.f32 %v1204, %v1253
        %v1286 = vsub.f32 %v1206, %v1254
        %v1287 = vsub.f32 %v1208, %v1255
        %v1288 = vsub.f32 %v1210, %v1256
        %v1289 = vsub.f32 %v1212, %v1257
        %v1290 = vsub.f32 %v1214, %v1258
        %v1291 = vsub.f32 %v1216, %v1259
        %v1292 = vsub.f32 %v1218, %v1260
        %v1293 = vsub.f32 %v1220, %v1261
        %v1294 = vsub.f32 %v1222, %v1262
        %v1295 = vsub.f32 %v1224, %v1263
        %v1296 = vsub.f32 %v1226, %v1264
        %v1297 = vsub.f32 %v1228, %v1265
        %v1298 = vsub.f32 %v1230, %v1266
        %v1299 = vsub.f32 %v1232, %v1267
        %v1300 = vsub.f32 %v1234, %v1268
        %v1301 = vsub.f32 %v1236, %v1269
        %v1302 = vsub.f32 %v1238, %v1270
        %v1303 = vand.u32 2147483647, %v1271
        %v1304 = vand.u32 2147483647, %v1272
        %v1305 = vand.u32 2147483647, %v1273
        %v1306 = vand.u32 2147483647, %v1274
        %v1307 = vand.u32 2147483647, %v1275
        %v1308 = vand.u32 2147483647, %v1276
        %v1309 = vand.u32 2147483647, %v1277
        %v1310 = vand.u32 2147483647, %v1278
        %v1311 = vand.u32 2147483647, %v1279
        %v1312 = vand.u32 2147483647, %v1280
        %v1313 = vand.u32 2147483647, %v1281
        %v1314 = vand.u32 2147483647, %v1282
        %v1315 = vand.u32 2147483647, %v1283
        %v1316 = vand.u32 2147483647, %v1284
        %v1317 = vand.u32 2147483647, %v1285
        %v1318 = vand.u32 2147483647, %v1286
        %v1319 = vand.u32 2147483647, %v1287
        %v1320 = vand.u32 2147483647, %v1288
        %v1321 = vand.u32 2147483647, %v1289
        %v1322 = vand.u32 2147483647, %v1290
        %v1323 = vand.u32 2147483647, %v1291
        %v1324 = vand.u32 2147483647, %v1292
        %v1325 = vand.u32 2147483647, %v1293
        %v1326 = vand.u32 2147483647, %v1294
        %v1327 = vand.u32 2147483647, %v1295
        %v1328 = vand.u32 2147483647, %v1296
        %v1329 = vand.u32 2147483647, %v1297
        %v1330 = vand.u32 2147483647, %v1298
        %v1331 = vand.u32 2147483647, %v1299
        %v1332 = vand.u32 2147483647, %v1300
        %v1333 = vand.u32 2147483647, %v1301
        %v1334 = vand.u32 2147483647, %v1302
        %v1335 = vrsqrt.pop %v1303
        %v1336 = vrsqrt.pop %v1304
        %v1337 = vrsqrt.pop %v1305
        %v1338 = vrsqrt.pop %v1306
        %v1339 = vrsqrt.pop %v1307
        %v1340 = vrsqrt.pop %v1308
        %v1341 = vrsqrt.pop %v1309
        %v1342 = vrsqrt.pop %v1310
        %v1343 = vrsqrt.pop %v1311
        %v1344 = vrsqrt.pop %v1312
        %v1345 = vrsqrt.pop %v1313
        %v1346 = vrsqrt.pop %v1314
        %v1347 = vrsqrt.pop %v1315
        %v1348 = vrsqrt.pop %v1316
        %v1349 = vrsqrt.pop %v1317
        %v1350 = vrsqrt.pop %v1318
        %v1351 = vrsqrt.pop %v1319
        %v1352 = vrsqrt.pop %v1320
        %v1353 = vrsqrt.pop %v1321
        %v1354 = vrsqrt.pop %v1322
        %v1355 = vrsqrt.pop %v1323
        %v1356 = vrsqrt.pop %v1324
        %v1357 = vrsqrt.pop %v1325
        %v1358 = vrsqrt.pop %v1326
        %v1359 = vrsqrt.pop %v1327
        %v1360 = vrsqrt.pop %v1328
        %v1361 = vrsqrt.pop %v1329
        %v1362 = vrsqrt.pop %v1330
        %v1363 = vrsqrt.pop %v1331
        %v1364 = vrsqrt.pop %v1332
        %v1365 = vrsqrt.pop %v1333
        %v1366 = vrsqrt.pop %v1334
        %1368 = vset.pattern.permute.xlu0 0
        %1369 = vperm.xlu0 %1368, %v1335
        %v1370 = vpop.permute.xlu0 %1369
        %1373 = vset.pattern.permute.xlu0 0
        %1374 = vperm.xlu0 %1373, %v1336
        %v1375 = vpop.permute.xlu0 %1374
        %1378 = vset.pattern.permute.xlu0 0
        %1379 = vperm.xlu0 %1378, %v1337
        %v1380 = vpop.permute.xlu0 %1379
        %1383 = vset.pattern.permute.xlu0 0
        %1384 = vperm.xlu0 %1383, %v1338
        %v1385 = vpop.permute.xlu0 %1384
        %1388 = vset.pattern.permute.xlu0 0
        %1389 = vperm.xlu0 %1388, %v1339
        %v1390 = vpop.permute.xlu0 %1389
        %1393 = vset.pattern.permute.xlu0 0
        %1394 = vperm.xlu0 %1393, %v1340
        %v1395 = vpop.permute.xlu0 %1394
        %1398 = vset.pattern.permute.xlu0 0
        %1399 = vperm.xlu0 %1398, %v1341
        %v1400 = vpop.permute.xlu0 %1399
        %1403 = vset.pattern.permute.xlu0 0
        %1404 = vperm.xlu0 %1403, %v1342
        %v1405 = vpop.permute.xlu0 %1404
        %1408 = vset.pattern.permute.xlu0 0
        %1409 = vperm.xlu0 %1408, %v1343
        %v1410 = vpop.permute.xlu0 %1409
        %1413 = vset.pattern.permute.xlu0 0
        %1414 = vperm.xlu0 %1413, %v1344
        %v1415 = vpop.permute.xlu0 %1414
        %1418 = vset.pattern.permute.xlu0 0
        %1419 = vperm.xlu0 %1418, %v1345
        %v1420 = vpop.permute.xlu0 %1419
        %1423 = vset.pattern.permute.xlu0 0
        %1424 = vperm.xlu0 %1423, %v1346
        %v1425 = vpop.permute.xlu0 %1424
        %1428 = vset.pattern.permute.xlu0 0
        %1429 = vperm.xlu0 %1428, %v1347
        %v1430 = vpop.permute.xlu0 %1429
        %1433 = vset.pattern.permute.xlu0 0
        %1434 = vperm.xlu0 %1433, %v1348
        %v1435 = vpop.permute.xlu0 %1434
        %1438 = vset.pattern.permute.xlu0 0
        %1439 = vperm.xlu0 %1438, %v1349
        %v1440 = vpop.permute.xlu0 %1439
        %1443 = vset.pattern.permute.xlu0 0
        %1444 = vperm.xlu0 %1443, %v1350
        %v1445 = vpop.permute.xlu0 %1444
        %1448 = vset.pattern.permute.xlu0 0
        %1449 = vperm.xlu0 %1448, %v1351
        %v1450 = vpop.permute.xlu0 %1449
        %1453 = vset.pattern.permute.xlu0 0
        %1454 = vperm.xlu0 %1453, %v1352
        %v1455 = vpop.permute.xlu0 %1454
        %1458 = vset.pattern.permute.xlu0 0
        %1459 = vperm.xlu0 %1458, %v1353
        %v1460 = vpop.permute.xlu0 %1459
        %1463 = vset.pattern.permute.xlu0 0
        %1464 = vperm.xlu0 %1463, %v1354
        %v1465 = vpop.permute.xlu0 %1464
        %1468 = vset.pattern.permute.xlu0 0
        %1469 = vperm.xlu0 %1468, %v1355
        %v1470 = vpop.permute.xlu0 %1469
        %1473 = vset.pattern.permute.xlu0 0
        %1474 = vperm.xlu0 %1473, %v1356
        %v1475 = vpop.permute.xlu0 %1474
        %1478 = vset.pattern.permute.xlu0 0
        %1479 = vperm.xlu0 %1478, %v1357
        %v1480 = vpop.permute.xlu0 %1479
        %1483 = vset.pattern.permute.xlu0 0
        %1484 = vperm.xlu0 %1483, %v1358
        %v1485 = vpop.permute.xlu0 %1484
        %1488 = vset.pattern.permute.xlu0 0
        %1489 = vperm.xlu0 %1488, %v1359
        %v1490 = vpop.permute.xlu0 %1489
        %1493 = vset.pattern.permute.xlu0 0
        %1494 = vperm.xlu0 %1493, %v1360
        %v1495 = vpop.permute.xlu0 %1494
        %1498 = vset.pattern.permute.xlu0 0
        %1499 = vperm.xlu0 %1498, %v1361
        %v1500 = vpop.permute.xlu0 %1499
        %1503 = vset.pattern.permute.xlu0 0
        %1504 = vperm.xlu0 %1503, %v1362
        %v1505 = vpop.permute.xlu0 %1504
        %1508 = vset.pattern.permute.xlu0 0
        %1509 = vperm.xlu0 %1508, %v1363
        %v1510 = vpop.permute.xlu0 %1509
        %1513 = vset.pattern.permute.xlu0 0
        %1514 = vperm.xlu0 %1513, %v1364
        %v1515 = vpop.permute.xlu0 %1514
        %1518 = vset.pattern.permute.xlu0 0
        %1519 = vperm.xlu0 %1518, %v1365
        %v1520 = vpop.permute.xlu0 %1519
        %1523 = vset.pattern.permute.xlu0 0
        %1524 = vperm.xlu0 %1523, %v1366
        %v1525 = vpop.permute.xlu0 %1524
        %v1527 = vmul.f32 %v1370, %v1017
        %v1528 = vmul.f32 %v1375, %v1020
        %v1529 = vmul.f32 %v1380, %v1025
        %v1530 = vmul.f32 %v1385, %v1028
        %v1531 = vmul.f32 %v1390, %v1033
        %v1532 = vmul.f32 %v1395, %v1036
        %v1533 = vmul.f32 %v1400, %v1041
        %v1534 = vmul.f32 %v1405, %v1044
        %v1535 = vmul.f32 %v1410, %v1049
        %v1536 = vmul.f32 %v1415, %v1052
        %v1537 = vmul.f32 %v1420, %v1057
        %v1538 = vmul.f32 %v1425, %v1060
        %v1539 = vmul.f32 %v1430, %v1065
        %v1540 = vmul.f32 %v1435, %v1068
        %v1541 = vmul.f32 %v1440, %v1073
        %v1542 = vmul.f32 %v1445, %v1076
        %v1543 = vmul.f32 %v1450, %v1081
        %v1544 = vmul.f32 %v1455, %v1084
        %v1545 = vmul.f32 %v1460, %v1089
        %v1546 = vmul.f32 %v1465, %v1092
        %v1547 = vmul.f32 %v1470, %v1097
        %v1548 = vmul.f32 %v1475, %v1100
        %v1549 = vmul.f32 %v1480, %v1105
        %v1550 = vmul.f32 %v1485, %v1108
        %v1551 = vmul.f32 %v1490, %v1113
        %v1552 = vmul.f32 %v1495, %v1116
        %v1553 = vmul.f32 %v1500, %v1121
        %v1554 = vmul.f32 %v1505, %v1124
        %v1555 = vmul.f32 %v1510, %v1129
        %v1556 = vmul.f32 %v1515, %v1132
        %v1557 = vmul.f32 %v1520, %v1137
        %v1558 = vmul.f32 %v1525, %v1140
        %1559 = vst [vmem:[%s177] sm:$0xff] %v1527
        %1560 = vst [vmem:[%s177 + $0x8] sm:$0xff] %v1528
        %1561 = vst [vmem:[%s177 + $0x10] sm:$0xff] %v1529
        %1562 = vst [vmem:[%s177 + $0x18] sm:$0xff] %v1530
        %1563 = vst [vmem:[%s177 + $0x20] sm:$0xff] %v1531
        %1564 = vst [vmem:[%s177 + $0x28] sm:$0xff] %v1532
        %1565 = vst [vmem:[%s177 + $0x30] sm:$0xff] %v1533
        %1566 = vst [vmem:[%s177 + $0x38] sm:$0xff] %v1534
        %1567 = vst [vmem:[%s177 + $0x40] sm:$0xff] %v1535
        %1568 = vst [vmem:[%s177 + $0x48] sm:$0xff] %v1536
        %1569 = vst [vmem:[%s177 + $0x50] sm:$0xff] %v1537
        %1570 = vst [vmem:[%s177 + $0x58] sm:$0xff] %v1538
        %1571 = vst [vmem:[%s177 + $0x60] sm:$0xff] %v1539
        %1572 = vst [vmem:[%s177 + $0x68] sm:$0xff] %v1540
        %1573 = vst [vmem:[%s177 + $0x70] sm:$0xff] %v1541
        %1574 = vst [vmem:[%s177 + $0x78] sm:$0xff] %v1542
        %1575 = vst [vmem:[%s177 + $0x80] sm:$0xff] %v1543
        %1576 = vst [vmem:[%s177 + $0x88] sm:$0xff] %v1544
        %1577 = vst [vmem:[%s177 + $0x90] sm:$0xff] %v1545
        %1578 = vst [vmem:[%s177 + $0x98] sm:$0xff] %v1546
        %1579 = vst [vmem:[%s177 + $0xa0] sm:$0xff] %v1547
        %1580 = vst [vmem:[%s177 + $0xa8] sm:$0xff] %v1548
        %1581 = vst [vmem:[%s177 + $0xb0] sm:$0xff] %v1549
        %1582 = vst [vmem:[%s177 + $0xb8] sm:$0xff] %v1550
        %1583 = vst [vmem:[%s177 + $0xc0] sm:$0xff] %v1551
        %1584 = vst [vmem:[%s177 + $0xc8] sm:$0xff] %v1552
        %1585 = vst [vmem:[%s177 + $0xd0] sm:$0xff] %v1553
        %1586 = vst [vmem:[%s177 + $0xd8] sm:$0xff] %v1554
        %1587 = vst [vmem:[%s177 + $0xe0] sm:$0xff] %v1555
        %1588 = vst [vmem:[%s177 + $0xe8] sm:$0xff] %v1556
        %1589 = vst [vmem:[%s177 + $0xf0] sm:$0xff] %v1557
        %1590 = vst [vmem:[%s177 + $0xf8] sm:$0xff] %v1558
        %s1591 = sand.u32 %s75, 1
        %s1592 = scalar_lea.sflag [#allocation4], %s1591
        %s1593 = sand.u32 %s75, 1
        %s1594 = smul.addr %s1593, 256
        %s1595 = scalar_lea.vmem [#allocation7], %s1594
        // Predicated region
        $region37: #{tpu_custom_call.1} parent=27 // pred_check
          %p1596 = pneg %p85
        $region38: #{tpu_custom_call.1} parent=27 // pred_check_branch
          %1598 = sbr.rel (%p1596) target = $region40
        $region39: #{tpu_custom_call.1} parent=27 // pred_region
          %s1599 = smul.u32 32, %s20
          %s1601 = ssub.s32 4096, 4096
          %1602 = vsyncadd %s1592, %s1601
          %s1603 = smul.addr %s1599, 128
          %s1604 = scalar_lea.hbm %s2, %s1603
          %s1605 = sshll.u32 %s1595, 4
          %s1606 = int_to_ptr.vmem [resolvable:$true] %s1605
          %1611 = dma.vmem_to_hbm [thread:$0]  %s1606, 4096, %s1604, %s1592, 128, 128, 8
        $region40: #{tpu_custom_call.1} parent=27 // pred_fallthru
          _
      $region28: #{tpu_custom_call.1} parent=5 // pred_fallthru
        _
      %p1612 = scmp.le.s32.totalorder 2, %s15
      // Predicated region
      $region41: #{tpu_custom_call.1} parent=5 // pred_check
        %p1613 = pneg %p1612
      $region42: #{tpu_custom_call.1} parent=5 // pred_check_branch
        %1615 = sbr.rel (%p1613) target = $region44
      $region43: #{tpu_custom_call.1} parent=5 // pred_region
        %s1616 = ssub.s32 %s15, 2
        // Predicated region
        $region45: #{tpu_custom_call.1} parent=43 // pred_check
          %p1617 = pneg %p91
        $region46: #{tpu_custom_call.1} parent=43 // pred_check_branch
          %1619 = sbr.rel (%p1617) target = $region48
        $region47: #{tpu_custom_call.1} parent=43 // pred_region
          %s1620 = sand.u32 %s76, 1
          %s1621 = scalar_lea.sflag [#allocation4], %s1620
          %s1622 = sand.u32 %s76, 1
          %s1623 = smul.addr %s1622, 256
          %s1624 = scalar_lea.vmem [#allocation7], %s1623
          %1625 = dma.done %s1621, 4096
        $region48: #{tpu_custom_call.1} parent=43 // pred_fallthru
          _
      $region44: #{tpu_custom_call.1} parent=5 // pred_fallthru
        _
    $region6: #{tpu_custom_call.1} parent=1 // loop_footer
      %s19 = sadd.s32 1, %s15
    $region7: #{tpu_custom_call.1} parent=1 // loop_footer_branch
      %14 = sbr.rel target = $region3
    $region8: #{tpu_custom_call.1} parent=1 // loop_exit
      _
    %1626 = vsyncpa [#allocation3], 1
    %s1627 = scalar_lea.sflag [#allocation3], 1
    %1628 = vsyncpa %s1627, 1
    %1629 = vsyncpa [#allocation6], 1
    %1630 = vsyncpa [#allocation4], 1
    %s1631 = scalar_lea.sflag [#allocation4], 1
    %1632 = vsyncpa %s1631, 1

</llo_original>
